<compile_context>
chip_gen: v7x
topology: tpu7x:2x2x1
jax: 0.10.0
libtpu: 0.0.40
codegen_flags: <defaults>
</compile_context>

<pallas_src>
import functools

import jax
import jax.numpy as jnp
from jax.experimental import pallas as pl
from jax.experimental.pallas import tpu as pltpu


def _round_up(v, m):
    return (v + m - 1) // m * m


# ---------------------------------------------------------------------------
# Pallas kernel: one fused SAGEConv layer, tiled over (row tile i, K tile k)
# ---------------------------------------------------------------------------
def _sage_layer_kernel(adj_ref, xk_ref, xi_ref, wcat_ref, b_ref,
                       o_ref, acc_ref, *, apply_relu):
    k = pl.program_id(1)

    @pl.when(k == 0)
    def _():
        acc_ref[...] = jnp.zeros_like(acc_ref)

    # Aggregate neighbor features on the MXU (bf16 inputs, f32 accumulate):
    #   (TM, TK) @ (TK, F_in_pad) -> (TM, F_in_pad)
    acc_ref[...] += jnp.dot(adj_ref[...], xk_ref[...],
                            preferred_element_type=jnp.float32)

    @pl.when(k == pl.num_programs(1) - 1)
    def _():
        neigh = acc_ref[...]                                  # (TM, F_in_pad) f32
        x_self = xi_ref[...].astype(jnp.float32)              # (TM, F_in_pad)
        h = jnp.concatenate([neigh, x_self], axis=-1)         # (TM, 2*F_in_pad)
        out = jnp.dot(h, wcat_ref[...],
                      preferred_element_type=jnp.float32) + b_ref[...]
        if apply_relu:
            out = jnp.maximum(out, 0.0)
        o_ref[...] = out.astype(o_ref.dtype)


def sage_layer(adj_p, x_p, w_cat, b_p, *, tm, tk, apply_relu):
    """One SAGEConv layer. Inputs are pre-padded: adj_p (Np,Np) bf16,
    x_p (Np,Fin_pad) bf16, w_cat (2*Fin_pad,Fout_pad) f32, b_p (1,Fout_pad) f32."""
    n_pad = adj_p.shape[0]
    f_in_pad = x_p.shape[1]
    f_out_pad = w_cat.shape[1]
    kernel = functools.partial(_sage_layer_kernel, apply_relu=apply_relu)

    return pl.pallas_call(
        kernel,
        out_shape=jax.ShapeDtypeStruct((n_pad, f_out_pad), jnp.float32),
        grid_spec=pltpu.PrefetchScalarGridSpec(
            num_scalar_prefetch=0,
            grid=(n_pad // tm, n_pad // tk),
            in_specs=[
                # adjacency tile (streamed, pipelined)
                pl.BlockSpec((tm, tk), lambda i, k: (i, k)),
                # x, k-tile (aggregation contraction operand)
                pl.BlockSpec((tk, f_in_pad), lambda i, k: (k, 0)),
                # x, row-tile (root / self term)
                pl.BlockSpec((tm, f_in_pad), lambda i, k: (i, 0)),
                # fused weights [W_l ; W_r] (resident)
                pl.BlockSpec((2 * f_in_pad, f_out_pad), lambda i, k: (0, 0)),
                # bias (resident)
                pl.BlockSpec((1, f_out_pad), lambda i, k: (0, 0)),
            ],
            out_specs=pl.BlockSpec((tm, f_out_pad), lambda i, k: (i, 0)),
            scratch_shapes=[pltpu.VMEM((tm, f_in_pad), jnp.float32)],
        ),
        compiler_params=pltpu.CompilerParams(
            dimension_semantics=("parallel", "arbitrary"),
            vmem_limit_bytes=32 * 1024 * 1024,
        ),
    )(adj_p, x_p, x_p, w_cat, b_p)


# ---------------------------------------------------------------------------
# SAGE model: parameter construction + forward pass calling the kernel
# ---------------------------------------------------------------------------
def init_sage_params(key, in_channels, hidden_channels, out_channels,
                     num_layers):
    dims = ([in_channels]
            + [hidden_channels] * (num_layers - 1)
            + [out_channels])
    params = []
    for layer in range(num_layers):
        f_in, f_out = dims[layer], dims[layer + 1]
        key, k_l, k_r = jax.random.split(key, 3)
        scale = 1.0 / jnp.sqrt(jnp.float32(f_in))
        w_l = jax.random.uniform(k_l, (f_in, f_out), jnp.float32,
                                 minval=-scale, maxval=scale)
        w_r = jax.random.uniform(k_r, (f_in, f_out), jnp.float32,
                                 minval=-scale, maxval=scale)
        b = jnp.zeros((1, f_out), jnp.float32)
        params.append((w_l, w_r, b))
    return params


def sage_forward(params, x, adj_t):
    """Forward pass of SAGE (inference: dropout is identity)."""
    n = x.shape[0]

    # Mean normalization folded into the adjacency ONCE (reused every layer).
    deg = jnp.sum(adj_t, axis=1, keepdims=True)                 # (N, 1)
    inv_deg = jnp.where(deg > 0, 1.0 / deg, 0.0).astype(jnp.float32)
    adj_norm = adj_t * inv_deg                                  # f32 scale, then bf16

    # Tile / padding choices: 128-aligned N, tiles up to 512 (fits all gens).
    n_pad = _round_up(n, 128)
    if n_pad % 512 == 0:
        tile = 512
    elif n_pad % 256 == 0:
        tile = 256
    else:
        tile = 128

    adj_p = jnp.pad(adj_norm.astype(jnp.bfloat16),
                    ((0, n_pad - n), (0, n_pad - n)))

    h = x
    num_layers = len(params)
    for i, (w_l, w_r, b) in enumerate(params):
        is_last = (i == num_layers - 1)
        f_in, f_out = w_l.shape
        f_in_pad = _round_up(f_in, 128)
        f_out_pad = _round_up(f_out, 128)

        h_p = jnp.pad(h.astype(jnp.bfloat16),
                      ((0, n_pad - n), (0, f_in_pad - f_in)))
        w_l_p = jnp.pad(w_l, ((0, f_in_pad - f_in), (0, f_out_pad - f_out)))
        w_r_p = jnp.pad(w_r, ((0, f_in_pad - f_in), (0, f_out_pad - f_out)))
        w_cat = jnp.concatenate([w_l_p, w_r_p], axis=0)         # (2*Fin_pad, Fout_pad)
        b_p = jnp.pad(b, ((0, 0), (0, f_out_pad - f_out)))

        out_p = sage_layer(adj_p, h_p, w_cat, b_p,
                           tm=tile, tk=tile, apply_relu=not is_last)
        h = out_p[:n, :f_out]
    return h


# ---------------------------------------------------------------------------
# Reference (pure JAX, same bf16-input / f32-accumulate numerics) for a check
# ---------------------------------------------------------------------------
def sage_forward_ref(params, x, adj_t):
    deg = jnp.sum(adj_t, axis=1, keepdims=True)
    inv_deg = jnp.where(deg > 0, 1.0 / deg, 0.0)
    adj_norm = (adj_t * inv_deg).astype(jnp.bfloat16)
    num_layers = len(params)
    h = x
    for i, (w_l, w_r, b) in enumerate(params):
        hb = h.astype(jnp.bfloat16)
        neigh = jnp.dot(adj_norm, hb, preferred_element_type=jnp.float32)
        out = (jnp.dot(neigh, w_l, preferred_element_type=jnp.float32)
               + jnp.dot(hb.astype(jnp.float32), w_r,
                         preferred_element_type=jnp.float32)
               + b)
        if i != num_layers - 1:
            out = jnp.maximum(out, 0.0)
        h = out
    return h


if __name__ == "__main__":
    # Small, deterministic example graph.
    N = 64                 # number of nodes
    in_channels = 32
    hidden_channels = 32
    out_channels = 16
    num_layers = 3
    dropout = 0.5          # inference -> identity

    key = jax.random.PRNGKey(0)
    k_x, k_adj, k_par = jax.random.split(key, 3)

    x = jax.random.normal(k_x, (N, in_channels), jnp.float32)
    # Random sparse-ish dense adjacency (adj_t), with self loops.
    adj_t = jax.random.bernoulli(k_adj, p=0.1, shape=(N, N)).astype(jnp.float32)
    adj_t = jnp.maximum(adj_t, jnp.eye(N, dtype=jnp.float32))

    params = init_sage_params(k_par, in_channels, hidden_channels,
                              out_channels, num_layers)

    out = sage_forward(params, x, adj_t)
    out = jax.block_until_ready(out)

    ref = sage_forward_ref(params, x, adj_t)
    assert out.shape == (N, out_channels)
    assert jnp.allclose(out, ref, atol=1e-2, rtol=1e-2), "mismatch vs reference"

    print("KERNEL_OK")
</pallas_src>

<mosaic_0001>
module attributes {stable_mosaic.version = 11 : i64} {
  func.func @_sage_layer_kernel(%arg0: i32, %arg1: i32, %arg2: memref<128x128xbf16, #tpu.memory_space<vmem>>, %arg3: memref<128x128xbf16, #tpu.memory_space<vmem>>, %arg4: memref<128x128xbf16, #tpu.memory_space<vmem>>, %arg5: memref<256x128xf32, #tpu.memory_space<vmem>>, %arg6: memref<1x128xf32, #tpu.memory_space<vmem>>, %arg7: memref<128x128xf32, #tpu.memory_space<vmem>>, %arg8: memref<128x128xf32, #tpu.memory_space<vmem>>) attributes {dimension_semantics = [#tpu.dimension_semantics<parallel>, #tpu.dimension_semantics<arbitrary>], iteration_bounds = array<i64: 1, 1>, scalar_prefetch = 0 : i64, scratch_operands = 1 : i64, tpu.core_type = #tpu.core_type<tc>, window_params = [{transform_indices = @transform_0, window_bounds = array<i64: 128, 128>}, {transform_indices = @transform_1, window_bounds = array<i64: 128, 128>}, {transform_indices = @transform_2, window_bounds = array<i64: 128, 128>}, {pipeline_mode = #tpu.pipeline_mode<synchronous>, transform_indices = @transform_3, window_bounds = array<i64: 256, 128>}, {pipeline_mode = #tpu.pipeline_mode<synchronous>, transform_indices = @transform_4, window_bounds = array<i64: 1, 128>}, {transform_indices = @transform_5, window_bounds = array<i64: 128, 128>}]} {
    %c0_i32 = arith.constant 0 : i32
    %0 = arith.cmpi eq, %arg1, %c0_i32 : i32
    %1 = arith.extui %0 : i1 to i32
    %c0_i32_0 = arith.constant 0 : i32
    %2 = arith.cmpi ne, %1, %c0_i32_0 : i32
    scf.if %2 {
      %cst_10 = arith.constant 0.000000e+00 : f32
      %12 = vector.broadcast %cst_10 : f32 to vector<128x128xf32>
      %c0_11 = arith.constant 0 : index
      %c0_12 = arith.constant 0 : index
      %13 = vector.load %arg8[%c0_11, %c0_12] : memref<128x128xf32, #tpu.memory_space<vmem>>, vector<128x128xf32>
      tpu.vector_store %arg8[%c0_11, %c0_12], %12 {strides = array<i32>} : memref<128x128xf32, #tpu.memory_space<vmem>>, vector<128x128xf32>,
    } else {
    }
    %c0 = arith.constant 0 : index
    %c0_1 = arith.constant 0 : index
    %3 = vector.load %arg8[%c0, %c0_1] : memref<128x128xf32, #tpu.memory_space<vmem>>, vector<128x128xf32>
    %c0_2 = arith.constant 0 : index
    %c0_3 = arith.constant 0 : index
    %4 = vector.load %arg2[%c0_2, %c0_3] : memref<128x128xbf16, #tpu.memory_space<vmem>>, vector<128x128xbf16>
    %c0_4 = arith.constant 0 : index
    %c0_5 = arith.constant 0 : index
    %5 = vector.load %arg3[%c0_4, %c0_5] : memref<128x128xbf16, #tpu.memory_space<vmem>>, vector<128x128xbf16>
    %cst = arith.constant dense<0.000000e+00> : vector<128x128xf32>
    %6 = tpu.matmul %4, %5, %cst {dimension_numbers = #tpu.dot_dimension_numbers<[1], [0], [0], [1], [0, 0, 1, 1], [], []>} : vector<128x128xbf16>, vector<128x128xbf16>, vector<128x128xf32> -> vector<128x128xf32>
    %7 = arith.addf %3, %6 : vector<128x128xf32>
    %c0_6 = arith.constant 0 : index
    %c0_7 = arith.constant 0 : index
    %8 = vector.load %arg8[%c0_6, %c0_7] : memref<128x128xf32, #tpu.memory_space<vmem>>, vector<128x128xf32>
    tpu.vector_store %arg8[%c0_6, %c0_7], %7 {strides = array<i32>} : memref<128x128xf32, #tpu.memory_space<vmem>>, vector<128x128xf32>,
    %c0_i32_8 = arith.constant 0 : i32
    %9 = arith.cmpi eq, %arg1, %c0_i32_8 : i32
    %10 = arith.extui %9 : i1 to i32
    %c0_i32_9 = arith.constant 0 : i32
    %11 = arith.cmpi ne, %10, %c0_i32_9 : i32
    scf.if %11 {
      %c0_10 = arith.constant 0 : index
      %c0_11 = arith.constant 0 : index
      %12 = vector.load %arg8[%c0_10, %c0_11] : memref<128x128xf32, #tpu.memory_space<vmem>>, vector<128x128xf32>
      %c0_12 = arith.constant 0 : index
      %c0_13 = arith.constant 0 : index
      %13 = vector.load %arg4[%c0_12, %c0_13] : memref<128x128xbf16, #tpu.memory_space<vmem>>, vector<128x128xbf16>
      %14 = arith.extf %13 : vector<128x128xbf16> to vector<128x128xf32>
      %15 = tpu.concatenate %12, %14 in 1 : vector<128x128xf32>, vector<128x128xf32> -> vector<128x256xf32>
      %c0_14 = arith.constant 0 : index
      %c0_15 = arith.constant 0 : index
      %16 = vector.load %arg5[%c0_14, %c0_15] : memref<256x128xf32, #tpu.memory_space<vmem>>, vector<256x128xf32>
      %cst_16 = arith.constant dense<0.000000e+00> : vector<128x128xf32>
      %17 = tpu.matmul %15, %16, %cst_16 {dimension_numbers = #tpu.dot_dimension_numbers<[1], [0], [0], [1], [0, 0, 1, 1], [], []>} : vector<128x256xf32>, vector<256x128xf32>, vector<128x128xf32> -> vector<128x128xf32>
      %c0_17 = arith.constant 0 : index
      %c0_18 = arith.constant 0 : index
      %18 = vector.load %arg6[%c0_17, %c0_18] : memref<1x128xf32, #tpu.memory_space<vmem>>, vector<1x128xf32>
      %19 = vector.broadcast %18 : vector<1x128xf32> to vector<128x128xf32>
      %20 = arith.addf %17, %19 : vector<128x128xf32>
      %cst_19 = arith.constant 0.000000e+00 : f32
      %21 = vector.broadcast %cst_19 : f32 to vector<128x128xf32>
      %22 = arith.maximumf %20, %21 : vector<128x128xf32>
      %c0_20 = arith.constant 0 : index
      %c0_21 = arith.constant 0 : index
      %23 = vector.load %arg7[%c0_20, %c0_21] : memref<128x128xf32, #tpu.memory_space<vmem>>, vector<128x128xf32>
      tpu.vector_store %arg7[%c0_20, %c0_21], %22 {strides = array<i32>} : memref<128x128xf32, #tpu.memory_space<vmem>>, vector<128x128xf32>,
    } else {
    }
    return
  }
  func.func @transform_0(%arg0: i32, %arg1: i32) -> (i32, i32) {
    %c0_i32 = arith.constant 0 : i32
    return %arg0, %arg1 : i32, i32
  }
  func.func @transform_1(%arg0: i32, %arg1: i32) -> (i32, i32) {
    %c0_i32 = arith.constant 0 : i32
    %c0_i32_0 = arith.constant 0 : i32
    return %arg1, %c0_i32 : i32, i32
  }
  func.func @transform_2(%arg0: i32, %arg1: i32) -> (i32, i32) {
    %c0_i32 = arith.constant 0 : i32
    %c0_i32_0 = arith.constant 0 : i32
    return %arg0, %c0_i32 : i32, i32
  }
  func.func @transform_3(%arg0: i32, %arg1: i32) -> (i32, i32) {
    %c0_i32 = arith.constant 0 : i32
    %c0_i32_0 = arith.constant 0 : i32
    %c0_i32_1 = arith.constant 0 : i32
    return %c0_i32, %c0_i32_0 : i32, i32
  }
  func.func @transform_4(%arg0: i32, %arg1: i32) -> (i32, i32) {
    %c0_i32 = arith.constant 0 : i32
    %c0_i32_0 = arith.constant 0 : i32
    %c0_i32_1 = arith.constant 0 : i32
    return %c0_i32, %c0_i32_0 : i32, i32
  }
  func.func @transform_5(%arg0: i32, %arg1: i32) -> (i32, i32) {
    %c0_i32 = arith.constant 0 : i32
    %c0_i32_0 = arith.constant 0 : i32
    return %arg0, %c0_i32 : i32, i32
  }
}

</mosaic_0001>

<llo_original>
// kernel: tpu_custom_call.1
$region0: #{tpu_custom_call.1}
  #allocation0 [shape = 'u32[]', space=smem, size = 0x4, offset = 0x4, fixed_abs, tag = 'smem constant byte address 0x4 - core index']
  #allocation1 [shape = 'u32[144,128]{1,0:T(1,128)}', space=vmem, size = 0x12000, scoped, tag = 'internal scratch']
  #allocation2 [shape = 'f32[128,128]{1,0:T(8,128)}', space=vmem, size = 0x10000, scoped, tag = 'scratch operand']
  %s0 = inlined_call_operand.hbm [shape: bf16[128,128], index: 0, kind: input, shape index: {}]
  %s1 = inlined_call_operand.hbm [shape: bf16[128,128], index: 1, kind: input, shape index: {}]
  %s2 = inlined_call_operand.hbm [shape: bf16[128,128], index: 2, kind: input, shape index: {}]
  %s3 = inlined_call_operand.hbm [shape: f32[256,128], index: 3, kind: input, shape index: {}]
  %s4 = inlined_call_operand.vmem [shape: f32[1,128], index: 4, kind: input, shape index: {}]
  %s5 = inlined_call_operand.hbm [shape: f32[128,128], index: 5, kind: output, shape index: {}]
  %s6 = sld [smem:[#allocation0]]
  $region54: #{tpu_custom_call.1} parent=0
    _
  %s8 = ssub.s32 1, %s6
  %s9 = scalar_select 0, %s8, %s6
  $region1: #{tpu_custom_call.1} parent=0
    #allocation3 [shape = 'u8[32768]{0}', space=vmem, size = 0x8000, scoped, tag = 'input window, operand 0, single buffered']
    #allocation4 [shape = 's32[1]{0}', space=sflag, size = 0x4, scoped, tag = 'scoped memory for tpu_custom_call.1']
    #allocation5 [shape = 's32[1]{0}', space=sflag, size = 0x4, scoped, tag = 'scoped memory for tpu_custom_call.1']
    #allocation6 [shape = 'u8[32768]{0}', space=vmem, size = 0x8000, scoped, tag = 'input window, operand 1, single buffered']
    #allocation7 [shape = 's32[1]{0}', space=sflag, size = 0x4, scoped, tag = 'scoped memory for tpu_custom_call.1']
    #allocation8 [shape = 'u8[32768]{0}', space=vmem, size = 0x8000, scoped, tag = 'input window, operand 2, single buffered']
    #allocation9 [shape = 'u8[131072]{0}', space=vmem, size = 0x20000, scoped, tag = 'input window, operand 3, single buffered']
    #allocation10 [shape = 's32[1]{0}', space=sflag, size = 0x4, scoped, tag = 'scoped memory for tpu_custom_call.1']
    #allocation11 [shape = 'u8[65536]{0}', space=vmem, size = 0x10000, scoped, tag = 'output window, operand 0, single buffered']
    %10 = vsyncpa [#allocation4], 0
    %11 = vsyncpa [#allocation7], 0
    %12 = vsyncpa [#allocation10], 0
    %13 = vsyncpa [#allocation5], 0
    // Predicated region
    $region2: #{tpu_custom_call.1} parent=1 // pred_check
      _
    $region3: #{tpu_custom_call.1} parent=1 // pred_check_branch
      %15 = sbr.rel (0) target = $region5
    $region4: #{tpu_custom_call.1} parent=1 // pred_region
      %s17 = ssub.s32 1024, 1024
      %18 = vsyncadd [#allocation4], %s17
      %s19 = sshll.u32 [#allocation3], 4
      %s20 = int_to_ptr.vmem [resolvable:$true] %s19
      %25 = dma.hbm_to_vmem [thread:$0]  %s0, 1024, %s20, [#allocation4], 64, 64, 4
    $region5: #{tpu_custom_call.1} parent=1 // pred_fallthru
      _
    // Predicated region
    $region6: #{tpu_custom_call.1} parent=1 // pred_check
      _
    $region7: #{tpu_custom_call.1} parent=1 // pred_check_branch
      %27 = sbr.rel (0) target = $region9
    $region8: #{tpu_custom_call.1} parent=1 // pred_region
      %s29 = ssub.s32 1024, 1024
      %30 = vsyncadd [#allocation7], %s29
      %s31 = sshll.u32 [#allocation6], 4
      %s32 = int_to_ptr.vmem [resolvable:$true] %s31
      %37 = dma.hbm_to_vmem [thread:$0]  %s1, 1024, %s32, [#allocation7], 64, 64, 4
    $region9: #{tpu_custom_call.1} parent=1 // pred_fallthru
      _
    // Predicated region
    $region10: #{tpu_custom_call.1} parent=1 // pred_check
      _
    $region11: #{tpu_custom_call.1} parent=1 // pred_check_branch
      %39 = sbr.rel (0) target = $region13
    $region12: #{tpu_custom_call.1} parent=1 // pred_region
      %s41 = ssub.s32 1024, 1024
      %42 = vsyncadd [#allocation7], %s41
      %s43 = sshll.u32 [#allocation8], 4
      %s44 = int_to_ptr.vmem [resolvable:$true] %s43
      %49 = dma.hbm_to_vmem [thread:$0]  %s2, 1024, %s44, [#allocation7], 64, 64, 4
    $region13: #{tpu_custom_call.1} parent=1 // pred_fallthru
      _
    // Predicated region
    $region14: #{tpu_custom_call.1} parent=1 // pred_check
      _
    $region15: #{tpu_custom_call.1} parent=1 // pred_check_branch
      %51 = sbr.rel (0) target = $region17
    $region16: #{tpu_custom_call.1} parent=1 // pred_region
      %s53 = ssub.s32 4096, 4096
      %54 = vsyncadd [#allocation10], %s53
      %s55 = sshll.u32 [#allocation9], 4
      %s56 = int_to_ptr.vmem [resolvable:$true] %s55
      %61 = dma.hbm_to_vmem [thread:$0]  %s3, 4096, %s56, [#allocation10], 128, 128, 8
    $region17: #{tpu_custom_call.1} parent=1 // pred_fallthru
      _
    // Predicated region
    $region18: #{tpu_custom_call.1} parent=1 // pred_check
      _
    $region19: #{tpu_custom_call.1} parent=1 // pred_check_branch
      %63 = sbr.rel (0) target = $region21
    $region20: #{tpu_custom_call.1} parent=1 // pred_region
      _
    $region21: #{tpu_custom_call.1} parent=1 // pred_fallthru
      _
    // Predicated region
    $region22: #{tpu_custom_call.1} parent=1 // pred_check
      _
    $region23: #{tpu_custom_call.1} parent=1 // pred_check_branch
      %65 = sbr.rel (0) target = $region25
    $region24: #{tpu_custom_call.1} parent=1 // pred_region
      %66 = dma.done [#allocation4], 1024
    $region25: #{tpu_custom_call.1} parent=1 // pred_fallthru
      _
    // Predicated region
    $region26: #{tpu_custom_call.1} parent=1 // pred_check
      _
    $region27: #{tpu_custom_call.1} parent=1 // pred_check_branch
      %68 = sbr.rel (0) target = $region29
    $region28: #{tpu_custom_call.1} parent=1 // pred_region
      %69 = dma.done [#allocation7], 1024
    $region29: #{tpu_custom_call.1} parent=1 // pred_fallthru
      _
    // Predicated region
    $region30: #{tpu_custom_call.1} parent=1 // pred_check
      _
    $region31: #{tpu_custom_call.1} parent=1 // pred_check_branch
      %71 = sbr.rel (0) target = $region33
    $region32: #{tpu_custom_call.1} parent=1 // pred_region
      %72 = dma.done [#allocation7], 1024
    $region33: #{tpu_custom_call.1} parent=1 // pred_fallthru
      _
    // Predicated region
    $region34: #{tpu_custom_call.1} parent=1 // pred_check
      _
    $region35: #{tpu_custom_call.1} parent=1 // pred_check_branch
      %74 = sbr.rel (0) target = $region37
    $region36: #{tpu_custom_call.1} parent=1 // pred_region
      %75 = dma.done [#allocation10], 4096
    $region37: #{tpu_custom_call.1} parent=1 // pred_fallthru
      _
    %p77 = scmp.eq.s32.totalorder 0, 0
    // Predicated region
    $region38: #{tpu_custom_call.1} parent=1 // pred_check
      %p78 = pneg %p77
    $region39: #{tpu_custom_call.1} parent=1 // pred_check_branch
      %80 = sbr.rel (%p78) target = $region41
    $region40: #{tpu_custom_call.1} parent=1 // pred_region
      %81 = vst [vmem:[#allocation2] sm:$0xff] 0.0
      %82 = vst [vmem:[#allocation2 + $0x8] sm:$0xff] 0.0
      %83 = vst [vmem:[#allocation2 + $0x10] sm:$0xff] 0.0
      %84 = vst [vmem:[#allocation2 + $0x18] sm:$0xff] 0.0
      %85 = vst [vmem:[#allocation2 + $0x20] sm:$0xff] 0.0
      %86 = vst [vmem:[#allocation2 + $0x28] sm:$0xff] 0.0
      %87 = vst [vmem:[#allocation2 + $0x30] sm:$0xff] 0.0
      %88 = vst [vmem:[#allocation2 + $0x38] sm:$0xff] 0.0
      %89 = vst [vmem:[#allocation2 + $0x40] sm:$0xff] 0.0
      %90 = vst [vmem:[#allocation2 + $0x48] sm:$0xff] 0.0
      %91 = vst [vmem:[#allocation2 + $0x50] sm:$0xff] 0.0
      %92 = vst [vmem:[#allocation2 + $0x58] sm:$0xff] 0.0
      %93 = vst [vmem:[#allocation2 + $0x60] sm:$0xff] 0.0
      %94 = vst [vmem:[#allocation2 + $0x68] sm:$0xff] 0.0
      %95 = vst [vmem:[#allocation2 + $0x70] sm:$0xff] 0.0
      %96 = vst [vmem:[#allocation2 + $0x78] sm:$0xff] 0.0
    $region41: #{tpu_custom_call.1} parent=1 // pred_fallthru
      _
    %v97 = vld [vmem:[#allocation2] sm:$0xff]
    %v98 = vld [vmem:[#allocation2 + $0x8] sm:$0xff]
    %v99 = vld [vmem:[#allocation2 + $0x10] sm:$0xff]
    %v100 = vld [vmem:[#allocation2 + $0x18] sm:$0xff]
    %v101 = vld [vmem:[#allocation2 + $0x20] sm:$0xff]
    %v102 = vld [vmem:[#allocation2 + $0x28] sm:$0xff]
    %v103 = vld [vmem:[#allocation2 + $0x30] sm:$0xff]
    %v104 = vld [vmem:[#allocation2 + $0x38] sm:$0xff]
    %v105 = vld [vmem:[#allocation2 + $0x40] sm:$0xff]
    %v106 = vld [vmem:[#allocation2 + $0x48] sm:$0xff]
    %v107 = vld [vmem:[#allocation2 + $0x50] sm:$0xff]
    %v108 = vld [vmem:[#allocation2 + $0x58] sm:$0xff]
    %v109 = vld [vmem:[#allocation2 + $0x60] sm:$0xff]
    %v110 = vld [vmem:[#allocation2 + $0x68] sm:$0xff]
    %v111 = vld [vmem:[#allocation2 + $0x70] sm:$0xff]
    %v112 = vld [vmem:[#allocation2 + $0x78] sm:$0xff]
    %v113 = vld [vmem:[#allocation3] sm:$0xf]
    %v114 = vld [vmem:[#allocation3 + $0x4] sm:$0xf]
    %v115 = vld [vmem:[#allocation3 + $0x8] sm:$0xf]
    %v116 = vld [vmem:[#allocation3 + $0xc] sm:$0xf]
    %v117 = vld [vmem:[#allocation3 + $0x10] sm:$0xf]
    %v118 = vld [vmem:[#allocation3 + $0x14] sm:$0xf]
    %v119 = vld [vmem:[#allocation3 + $0x18] sm:$0xf]
    %v120 = vld [vmem:[#allocation3 + $0x1c] sm:$0xf]
    %v121 = vld [vmem:[#allocation3 + $0x20] sm:$0xf]
    %v122 = vld [vmem:[#allocation3 + $0x24] sm:$0xf]
    %v123 = vld [vmem:[#allocation3 + $0x28] sm:$0xf]
    %v124 = vld [vmem:[#allocation3 + $0x2c] sm:$0xf]
    %v125 = vld [vmem:[#allocation3 + $0x30] sm:$0xf]
    %v126 = vld [vmem:[#allocation3 + $0x34] sm:$0xf]
    %v127 = vld [vmem:[#allocation3 + $0x38] sm:$0xf]
    %v128 = vld [vmem:[#allocation3 + $0x3c] sm:$0xf]
    %v129 = vld [vmem:[#allocation6] sm:$0xf]
    %v130 = vld [vmem:[#allocation6 + $0x4] sm:$0xf]
    %v131 = vld [vmem:[#allocation6 + $0x8] sm:$0xf]
    %v132 = vld [vmem:[#allocation6 + $0xc] sm:$0xf]
    %v133 = vld [vmem:[#allocation6 + $0x10] sm:$0xf]
    %v134 = vld [vmem:[#allocation6 + $0x14] sm:$0xf]
    %v135 = vld [vmem:[#allocation6 + $0x18] sm:$0xf]
    %v136 = vld [vmem:[#allocation6 + $0x1c] sm:$0xf]
    %v137 = vld [vmem:[#allocation6 + $0x20] sm:$0xf]
    %v138 = vld [vmem:[#allocation6 + $0x24] sm:$0xf]
    %v139 = vld [vmem:[#allocation6 + $0x28] sm:$0xf]
    %v140 = vld [vmem:[#allocation6 + $0x2c] sm:$0xf]
    %v141 = vld [vmem:[#allocation6 + $0x30] sm:$0xf]
    %v142 = vld [vmem:[#allocation6 + $0x34] sm:$0xf]
    %v143 = vld [vmem:[#allocation6 + $0x38] sm:$0xf]
    %v144 = vld [vmem:[#allocation6 + $0x3c] sm:$0xf]
    %v161 = vunpack.c.l.b16 %v113
    %v162 = vunpack.c.l.b16 %v114
    %v163 = vunpack.c.l.b16 %v115
    %v164 = vunpack.c.l.b16 %v116
    %v165 = vunpack.c.l.b16 %v117
    %v166 = vunpack.c.l.b16 %v118
    %v167 = vunpack.c.l.b16 %v119
    %v168 = vunpack.c.l.b16 %v120
    %v169 = vunpack.c.l.b16 %v121
    %v170 = vunpack.c.l.b16 %v122
    %v171 = vunpack.c.l.b16 %v123
    %v172 = vunpack.c.l.b16 %v124
    %v173 = vunpack.c.l.b16 %v125
    %v174 = vunpack.c.l.b16 %v126
    %v175 = vunpack.c.l.b16 %v127
    %v176 = vunpack.c.l.b16 %v128
    %v177 = vpack.c.b16 %v162, %v161
    %v178 = vpack.c.b16 %v164, %v163
    %v179 = vpack.c.b16 %v166, %v165
    %v180 = vpack.c.b16 %v168, %v167
    %v181 = vpack.c.b16 %v170, %v169
    %v182 = vpack.c.b16 %v172, %v171
    %v183 = vpack.c.b16 %v174, %v173
    %v184 = vpack.c.b16 %v176, %v175
    %v209 = vunpack.c.l.b16 %v129
    %v210 = vunpack.c.l.b16 %v130
    %v211 = vunpack.c.l.b16 %v131
    %v212 = vunpack.c.l.b16 %v132
    %v213 = vunpack.c.l.b16 %v133
    %v214 = vunpack.c.l.b16 %v134
    %v215 = vunpack.c.l.b16 %v135
    %v216 = vunpack.c.l.b16 %v136
    %v217 = vunpack.c.l.b16 %v137
    %v218 = vunpack.c.l.b16 %v138
    %v219 = vunpack.c.l.b16 %v139
    %v220 = vunpack.c.l.b16 %v140
    %v221 = vunpack.c.l.b16 %v141
    %v222 = vunpack.c.l.b16 %v142
    %v223 = vunpack.c.l.b16 %v143
    %v224 = vunpack.c.l.b16 %v144
    %v225 = vpack.c.b16 %v210, %v209
    %v226 = vpack.c.b16 %v212, %v211
    %v227 = vpack.c.b16 %v214, %v213
    %v228 = vpack.c.b16 %v216, %v215
    %v229 = vpack.c.b16 %v218, %v217
    %v230 = vpack.c.b16 %v220, %v219
    %v231 = vpack.c.b16 %v222, %v221
    %v232 = vpack.c.b16 %v224, %v223
    %241 = vmatprep.subr.bf16.mxu0 0
    %242 = vmatpush1.bf16.msra.mxu0 %v225
    %243 = vmatprep.subr.bf16.mxu0 0
    %244 = vmatpush1.bf16.msra.mxu0 %v226
    %245 = vmatprep.subr.bf16.mxu0 0
    %246 = vmatpush1.bf16.msra.mxu0 %v227
    %247 = vmatprep.subr.bf16.mxu0 0
    %248 = vmatpush1.bf16.msra.mxu0 %v228
    %249 = vmatprep.subr.bf16.mxu0 0
    %250 = vmatpush1.bf16.msra.mxu0 %v229
    %251 = vmatprep.subr.bf16.mxu0 0
    %252 = vmatpush1.bf16.msra.mxu0 %v230
    %253 = vmatprep.subr.bf16.mxu0 0
    %254 = vmatpush1.bf16.msra.mxu0 %v231
    %255 = vmatprep.subr.bf16.mxu0 0
    %256 = vmatpush1.bf16.msra.mxu0 %v232
    %257 = vmatprep.subr.bf16.mxu0 0
    %258 = vmatpush1.bf16.msra.mxu0 0
    %259 = vmatprep.subr.bf16.mxu0 0
    %260 = vmatpush1.bf16.msra.mxu0 0
    %261 = vmatprep.subr.bf16.mxu0 0
    %262 = vmatpush1.bf16.msra.mxu0 0
    %263 = vmatprep.subr.bf16.mxu0 0
    %264 = vmatpush1.bf16.msra.mxu0 0
    %265 = vmatprep.subr.bf16.mxu0 0
    %266 = vmatpush1.bf16.msra.mxu0 0
    %267 = vmatprep.subr.bf16.mxu0 0
    %268 = vmatpush1.bf16.msra.mxu0 0
    %269 = vmatprep.subr.bf16.mxu0 0
    %270 = vmatpush1.bf16.msra.mxu0 0
    %271 = vmatprep.subr.bf16.mxu0 0
    %272 = vmatpush1.bf16.msra.mxu0 0
    %273 = vmatprep.mubr.bf16.mxu0 0
    %274 = vmatmul.mubr.bf16.gmra.mrb[0].mxu0 %v177
    %v275 = vpop.f32.mrb[0].mxu0
    %v276 = vadd.f32 0.0, %v275
    %v277 = vpop.f32.mrb[0].mxu0
    %v278 = vpop.f32.mrb[0].mxu0
    %v279 = vadd.f32 0.0, %v278
    %v280 = vpop.f32.mrb[0].mxu0
    %281 = vmatprep.mubr.bf16.mxu0 0
    %282 = vmatmul.mubr.bf16.gmra.mrb[0].mxu0 %v178
    %v283 = vpop.f32.mrb[0].mxu0
    %v284 = vadd.f32 0.0, %v283
    %v285 = vpop.f32.mrb[0].mxu0
    %v286 = vpop.f32.mrb[0].mxu0
    %v287 = vadd.f32 0.0, %v286
    %v288 = vpop.f32.mrb[0].mxu0
    %289 = vmatprep.mubr.bf16.mxu0 0
    %290 = vmatmul.mubr.bf16.gmra.mrb[0].mxu0 %v179
    %v291 = vpop.f32.mrb[0].mxu0
    %v292 = vadd.f32 0.0, %v291
    %v293 = vpop.f32.mrb[0].mxu0
    %v294 = vpop.f32.mrb[0].mxu0
    %v295 = vadd.f32 0.0, %v294
    %v296 = vpop.f32.mrb[0].mxu0
    %297 = vmatprep.mubr.bf16.mxu0 0
    %298 = vmatmul.mubr.bf16.gmra.mrb[0].mxu0 %v180
    %v299 = vpop.f32.mrb[0].mxu0
    %v300 = vadd.f32 0.0, %v299
    %v301 = vpop.f32.mrb[0].mxu0
    %v302 = vpop.f32.mrb[0].mxu0
    %v303 = vadd.f32 0.0, %v302
    %v304 = vpop.f32.mrb[0].mxu0
    %305 = vmatprep.mubr.bf16.mxu0 0
    %306 = vmatmul.mubr.bf16.gmra.mrb[0].mxu0 %v181
    %v307 = vpop.f32.mrb[0].mxu0
    %v308 = vadd.f32 0.0, %v307
    %v309 = vpop.f32.mrb[0].mxu0
    %v310 = vpop.f32.mrb[0].mxu0
    %v311 = vadd.f32 0.0, %v310
    %v312 = vpop.f32.mrb[0].mxu0
    %313 = vmatprep.mubr.bf16.mxu0 0
    %314 = vmatmul.mubr.bf16.gmra.mrb[0].mxu0 %v182
    %v315 = vpop.f32.mrb[0].mxu0
    %v316 = vadd.f32 0.0, %v315
    %v317 = vpop.f32.mrb[0].mxu0
    %v318 = vpop.f32.mrb[0].mxu0
    %v319 = vadd.f32 0.0, %v318
    %v320 = vpop.f32.mrb[0].mxu0
    %321 = vmatprep.mubr.bf16.mxu0 0
    %322 = vmatmul.mubr.bf16.gmra.mrb[0].mxu0 %v183
    %v323 = vpop.f32.mrb[0].mxu0
    %v324 = vadd.f32 0.0, %v323
    %v325 = vpop.f32.mrb[0].mxu0
    %v326 = vpop.f32.mrb[0].mxu0
    %v327 = vadd.f32 0.0, %v326
    %v328 = vpop.f32.mrb[0].mxu0
    %329 = vmatprep.mubr.bf16.mxu0 0
    %330 = vmatmul.mubr.bf16.gmra.mrb[0].mxu0 %v184
    %v331 = vpop.f32.mrb[0].mxu0
    %v332 = vadd.f32 0.0, %v331
    %v333 = vpop.f32.mrb[0].mxu0
    %v334 = vpop.f32.mrb[0].mxu0
    %v335 = vadd.f32 0.0, %v334
    %v336 = vpop.f32.mrb[0].mxu0
    %337 = vdwg.mxu0
    %v338 = vadd.f32 %v97, %v276
    %v339 = vadd.f32 %v98, %v279
    %v340 = vadd.f32 %v99, %v284
    %v341 = vadd.f32 %v100, %v287
    %v342 = vadd.f32 %v101, %v292
    %v343 = vadd.f32 %v102, %v295
    %v344 = vadd.f32 %v103, %v300
    %v345 = vadd.f32 %v104, %v303
    %v346 = vadd.f32 %v105, %v308
    %v347 = vadd.f32 %v106, %v311
    %v348 = vadd.f32 %v107, %v316
    %v349 = vadd.f32 %v108, %v319
    %v350 = vadd.f32 %v109, %v324
    %v351 = vadd.f32 %v110, %v327
    %v352 = vadd.f32 %v111, %v332
    %v353 = vadd.f32 %v112, %v335
    %354 = vst [vmem:[#allocation2] sm:$0xff] %v338
    %355 = vst [vmem:[#allocation2 + $0x8] sm:$0xff] %v339
    %356 = vst [vmem:[#allocation2 + $0x10] sm:$0xff] %v340
    %357 = vst [vmem:[#allocation2 + $0x18] sm:$0xff] %v341
    %358 = vst [vmem:[#allocation2 + $0x20] sm:$0xff] %v342
    %359 = vst [vmem:[#allocation2 + $0x28] sm:$0xff] %v343
    %360 = vst [vmem:[#allocation2 + $0x30] sm:$0xff] %v344
    %361 = vst [vmem:[#allocation2 + $0x38] sm:$0xff] %v345
    %362 = vst [vmem:[#allocation2 + $0x40] sm:$0xff] %v346
    %363 = vst [vmem:[#allocation2 + $0x48] sm:$0xff] %v347
    %364 = vst [vmem:[#allocation2 + $0x50] sm:$0xff] %v348
    %365 = vst [vmem:[#allocation2 + $0x58] sm:$0xff] %v349
    %366 = vst [vmem:[#allocation2 + $0x60] sm:$0xff] %v350
    %367 = vst [vmem:[#allocation2 + $0x68] sm:$0xff] %v351
    %368 = vst [vmem:[#allocation2 + $0x70] sm:$0xff] %v352
    %369 = vst [vmem:[#allocation2 + $0x78] sm:$0xff] %v353
    // Predicated region
    $region42: #{tpu_custom_call.1} parent=1 // pred_check
      %p370 = pneg %p77
    $region43: #{tpu_custom_call.1} parent=1 // pred_check_branch
      %372 = sbr.rel (%p370) target = $region45
    $region44: #{tpu_custom_call.1} parent=1 // pred_region
      %v373 = vld [vmem:[#allocation2] sm:$0xff]
      %v374 = vld [vmem:[#allocation2 + $0x8] sm:$0xff]
      %v375 = vld [vmem:[#allocation2 + $0x10] sm:$0xff]
      %v376 = vld [vmem:[#allocation2 + $0x18] sm:$0xff]
      %v377 = vld [vmem:[#allocation2 + $0x20] sm:$0xff]
      %v378 = vld [vmem:[#allocation2 + $0x28] sm:$0xff]
      %v379 = vld [vmem:[#allocation2 + $0x30] sm:$0xff]
      %v380 = vld [vmem:[#allocation2 + $0x38] sm:$0xff]
      %v381 = vld [vmem:[#allocation2 + $0x40] sm:$0xff]
      %v382 = vld [vmem:[#allocation2 + $0x48] sm:$0xff]
      %v383 = vld [vmem:[#allocation2 + $0x50] sm:$0xff]
      %v384 = vld [vmem:[#allocation2 + $0x58] sm:$0xff]
      %v385 = vld [vmem:[#allocation2 + $0x60] sm:$0xff]
      %v386 = vld [vmem:[#allocation2 + $0x68] sm:$0xff]
      %v387 = vld [vmem:[#allocation2 + $0x70] sm:$0xff]
      %v388 = vld [vmem:[#allocation2 + $0x78] sm:$0xff]
      %v389 = vld [vmem:[#allocation8] sm:$0xf]
      %v390 = vld [vmem:[#allocation8 + $0x4] sm:$0xf]
      %v391 = vld [vmem:[#allocation8 + $0x8] sm:$0xf]
      %v392 = vld [vmem:[#allocation8 + $0xc] sm:$0xf]
      %v393 = vld [vmem:[#allocation8 + $0x10] sm:$0xf]
      %v394 = vld [vmem:[#allocation8 + $0x14] sm:$0xf]
      %v395 = vld [vmem:[#allocation8 + $0x18] sm:$0xf]
      %v396 = vld [vmem:[#allocation8 + $0x1c] sm:$0xf]
      %v397 = vld [vmem:[#allocation8 + $0x20] sm:$0xf]
      %v398 = vld [vmem:[#allocation8 + $0x24] sm:$0xf]
      %v399 = vld [vmem:[#allocation8 + $0x28] sm:$0xf]
      %v400 = vld [vmem:[#allocation8 + $0x2c] sm:$0xf]
      %v401 = vld [vmem:[#allocation8 + $0x30] sm:$0xf]
      %v402 = vld [vmem:[#allocation8 + $0x34] sm:$0xf]
      %v403 = vld [vmem:[#allocation8 + $0x38] sm:$0xf]
      %v404 = vld [vmem:[#allocation8 + $0x3c] sm:$0xf]
      %v405 = vunpack.c.l.bf16 %v389
      %v406 = vunpack.c.l.bf16 %v390
      %v407 = vunpack.c.l.bf16 %v391
      %v408 = vunpack.c.l.bf16 %v392
      %v409 = vunpack.c.l.bf16 %v393
      %v410 = vunpack.c.l.bf16 %v394
      %v411 = vunpack.c.l.bf16 %v395
      %v412 = vunpack.c.l.bf16 %v396
      %v413 = vunpack.c.l.bf16 %v397
      %v414 = vunpack.c.l.bf16 %v398
      %v415 = vunpack.c.l.bf16 %v399
      %v416 = vunpack.c.l.bf16 %v400
      %v417 = vunpack.c.l.bf16 %v401
      %v418 = vunpack.c.l.bf16 %v402
      %v419 = vunpack.c.l.bf16 %v403
      %v420 = vunpack.c.l.bf16 %v404
      %v421 = vld [vmem:[#allocation9] sm:$0xff]
      %v422 = vld [vmem:[#allocation9 + $0x8] sm:$0xff]
      %v423 = vld [vmem:[#allocation9 + $0x10] sm:$0xff]
      %v424 = vld [vmem:[#allocation9 + $0x18] sm:$0xff]
      %v425 = vld [vmem:[#allocation9 + $0x20] sm:$0xff]
      %v426 = vld [vmem:[#allocation9 + $0x28] sm:$0xff]
      %v427 = vld [vmem:[#allocation9 + $0x30] sm:$0xff]
      %v428 = vld [vmem:[#allocation9 + $0x38] sm:$0xff]
      %v429 = vld [vmem:[#allocation9 + $0x40] sm:$0xff]
      %v430 = vld [vmem:[#allocation9 + $0x48] sm:$0xff]
      %v431 = vld [vmem:[#allocation9 + $0x50] sm:$0xff]
      %v432 = vld [vmem:[#allocation9 + $0x58] sm:$0xff]
      %v433 = vld [vmem:[#allocation9 + $0x60] sm:$0xff]
      %v434 = vld [vmem:[#allocation9 + $0x68] sm:$0xff]
      %v435 = vld [vmem:[#allocation9 + $0x70] sm:$0xff]
      %v436 = vld [vmem:[#allocation9 + $0x78] sm:$0xff]
      %v437 = vld [vmem:[#allocation9 + $0x80] sm:$0xff]
      %v438 = vld [vmem:[#allocation9 + $0x88] sm:$0xff]
      %v439 = vld [vmem:[#allocation9 + $0x90] sm:$0xff]
      %v440 = vld [vmem:[#allocation9 + $0x98] sm:$0xff]
      %v441 = vld [vmem:[#allocation9 + $0xa0] sm:$0xff]
      %v442 = vld [vmem:[#allocation9 + $0xa8] sm:$0xff]
      %v443 = vld [vmem:[#allocation9 + $0xb0] sm:$0xff]
      %v444 = vld [vmem:[#allocation9 + $0xb8] sm:$0xff]
      %v445 = vld [vmem:[#allocation9 + $0xc0] sm:$0xff]
      %v446 = vld [vmem:[#allocation9 + $0xc8] sm:$0xff]
      %v447 = vld [vmem:[#allocation9 + $0xd0] sm:$0xff]
      %v448 = vld [vmem:[#allocation9 + $0xd8] sm:$0xff]
      %v449 = vld [vmem:[#allocation9 + $0xe0] sm:$0xff]
      %v450 = vld [vmem:[#allocation9 + $0xe8] sm:$0xff]
      %v451 = vld [vmem:[#allocation9 + $0xf0] sm:$0xff]
      %v452 = vld [vmem:[#allocation9 + $0xf8] sm:$0xff]
      %v453 = vld [vmem:[%s4] sm:$0x1]
      %v455 = vlaneseq
      %v456 = vshrl.u32 %v455, 7
      %v457 = vsub.s32 0, %v456
      %v458 = vrot.slane %v453, %v457
      %460 = vmatprep.subr.mxu0 0.0
      %461 = vmatpush1.msra.mxu0 %v421
      %462 = vmatprep.subr.mxu0 0.0
      %463 = vmatpush1.msra.mxu0 %v422
      %464 = vmatprep.subr.mxu0 0.0
      %465 = vmatpush1.msra.mxu0 %v423
      %466 = vmatprep.subr.mxu0 0.0
      %467 = vmatpush1.msra.mxu0 %v424
      %468 = vmatprep.subr.mxu0 0.0
      %469 = vmatpush1.msra.mxu0 %v425
      %470 = vmatprep.subr.mxu0 0.0
      %471 = vmatpush1.msra.mxu0 %v426
      %472 = vmatprep.subr.mxu0 0.0
      %473 = vmatpush1.msra.mxu0 %v427
      %474 = vmatprep.subr.mxu0 0.0
      %475 = vmatpush1.msra.mxu0 %v428
      %476 = vmatprep.subr.mxu0 0.0
      %477 = vmatpush1.msra.mxu0 %v429
      %478 = vmatprep.subr.mxu0 0.0
      %479 = vmatpush1.msra.mxu0 %v430
      %480 = vmatprep.subr.mxu0 0.0
      %481 = vmatpush1.msra.mxu0 %v431
      %482 = vmatprep.subr.mxu0 0.0
      %483 = vmatpush1.msra.mxu0 %v432
      %484 = vmatprep.subr.mxu0 0.0
      %485 = vmatpush1.msra.mxu0 %v433
      %486 = vmatprep.subr.mxu0 0.0
      %487 = vmatpush1.msra.mxu0 %v434
      %488 = vmatprep.subr.mxu0 0.0
      %489 = vmatpush1.msra.mxu0 %v435
      %490 = vmatprep.subr.mxu0 0.0
      %491 = vmatpush1.msra.mxu0 %v436
      %492 = vmatprep.subr.mxu0 0.0
      %493 = vmatpush1.msra.mxu0 %v437
      %494 = vmatprep.subr.mxu0 0.0
      %495 = vmatpush1.msra.mxu0 %v438
      %496 = vmatprep.subr.mxu0 0.0
      %497 = vmatpush1.msra.mxu0 %v439
      %498 = vmatprep.subr.mxu0 0.0
      %499 = vmatpush1.msra.mxu0 %v440
      %500 = vmatprep.subr.mxu0 0.0
      %501 = vmatpush1.msra.mxu0 %v441
      %502 = vmatprep.subr.mxu0 0.0
      %503 = vmatpush1.msra.mxu0 %v442
      %504 = vmatprep.subr.mxu0 0.0
      %505 = vmatpush1.msra.mxu0 %v443
      %506 = vmatprep.subr.mxu0 0.0
      %507 = vmatpush1.msra.mxu0 %v444
      %508 = vmatprep.subr.mxu0 0.0
      %509 = vmatpush1.msra.mxu0 %v445
      %510 = vmatprep.subr.mxu0 0.0
      %511 = vmatpush1.msra.mxu0 %v446
      %512 = vmatprep.subr.mxu0 0.0
      %513 = vmatpush1.msra.mxu0 %v447
      %514 = vmatprep.subr.mxu0 0.0
      %515 = vmatpush1.msra.mxu0 %v448
      %516 = vmatprep.subr.mxu0 0.0
      %517 = vmatpush1.msra.mxu0 %v449
      %518 = vmatprep.subr.mxu0 0.0
      %519 = vmatpush1.msra.mxu0 %v450
      %520 = vmatprep.subr.mxu0 0.0
      %521 = vmatpush1.msra.mxu0 %v451
      %522 = vmatprep.subr.mxu0 0.0
      %523 = vmatpush1.msra.mxu0 %v452
      %524 = vmatprep.mubr.f32.mxu0 %v405
      %525 = vmatmul.mubr.f32.gmra.mrb[0].mxu0 %v373
      %v526 = vpop.f32.mrb[0].mxu0
      %v527 = vadd.f32 %v458, %v526
      %v528 = vpop.f32.mrb[0].mxu0
      %529 = vmatprep.mubr.f32.mxu0 %v406
      %530 = vmatmul.mubr.f32.gmra.mrb[0].mxu0 %v374
      %v531 = vpop.f32.mrb[0].mxu0
      %v532 = vadd.f32 %v458, %v531
      %v533 = vpop.f32.mrb[0].mxu0
      %534 = vmatprep.mubr.f32.mxu0 %v407
      %535 = vmatmul.mubr.f32.gmra.mrb[0].mxu0 %v375
      %v536 = vpop.f32.mrb[0].mxu0
      %v537 = vadd.f32 %v458, %v536
      %v538 = vpop.f32.mrb[0].mxu0
      %539 = vmatprep.mubr.f32.mxu0 %v408
      %540 = vmatmul.mubr.f32.gmra.mrb[0].mxu0 %v376
      %v541 = vpop.f32.mrb[0].mxu0
      %v542 = vadd.f32 %v458, %v541
      %v543 = vpop.f32.mrb[0].mxu0
      %544 = vmatprep.mubr.f32.mxu0 %v409
      %545 = vmatmul.mubr.f32.gmra.mrb[0].mxu0 %v377
      %v546 = vpop.f32.mrb[0].mxu0
      %v547 = vadd.f32 %v458, %v546
      %v548 = vpop.f32.mrb[0].mxu0
      %549 = vmatprep.mubr.f32.mxu0 %v410
      %550 = vmatmul.mubr.f32.gmra.mrb[0].mxu0 %v378
      %v551 = vpop.f32.mrb[0].mxu0
      %v552 = vadd.f32 %v458, %v551
      %v553 = vpop.f32.mrb[0].mxu0
      %554 = vmatprep.mubr.f32.mxu0 %v411
      %555 = vmatmul.mubr.f32.gmra.mrb[0].mxu0 %v379
      %v556 = vpop.f32.mrb[0].mxu0
      %v557 = vadd.f32 %v458, %v556
      %v558 = vpop.f32.mrb[0].mxu0
      %559 = vmatprep.mubr.f32.mxu0 %v412
      %560 = vmatmul.mubr.f32.gmra.mrb[0].mxu0 %v380
      %v561 = vpop.f32.mrb[0].mxu0
      %v562 = vadd.f32 %v458, %v561
      %v563 = vpop.f32.mrb[0].mxu0
      %564 = vmatprep.mubr.f32.mxu0 %v413
      %565 = vmatmul.mubr.f32.gmra.mrb[0].mxu0 %v381
      %v566 = vpop.f32.mrb[0].mxu0
      %v567 = vadd.f32 %v458, %v566
      %v568 = vpop.f32.mrb[0].mxu0
      %569 = vmatprep.mubr.f32.mxu0 %v414
      %570 = vmatmul.mubr.f32.gmra.mrb[0].mxu0 %v382
      %v571 = vpop.f32.mrb[0].mxu0
      %v572 = vadd.f32 %v458, %v571
      %v573 = vpop.f32.mrb[0].mxu0
      %574 = vmatprep.mubr.f32.mxu0 %v415
      %575 = vmatmul.mubr.f32.gmra.mrb[0].mxu0 %v383
      %v576 = vpop.f32.mrb[0].mxu0
      %v577 = vadd.f32 %v458, %v576
      %v578 = vpop.f32.mrb[0].mxu0
      %579 = vmatprep.mubr.f32.mxu0 %v416
      %580 = vmatmul.mubr.f32.gmra.mrb[0].mxu0 %v384
      %v581 = vpop.f32.mrb[0].mxu0
      %v582 = vadd.f32 %v458, %v581
      %v583 = vpop.f32.mrb[0].mxu0
      %584 = vmatprep.mubr.f32.mxu0 %v417
      %585 = vmatmul.mubr.f32.gmra.mrb[0].mxu0 %v385
      %v586 = vpop.f32.mrb[0].mxu0
      %v587 = vadd.f32 %v458, %v586
      %v588 = vpop.f32.mrb[0].mxu0
      %589 = vmatprep.mubr.f32.mxu0 %v418
      %590 = vmatmul.mubr.f32.gmra.mrb[0].mxu0 %v386
      %v591 = vpop.f32.mrb[0].mxu0
      %v592 = vadd.f32 %v458, %v591
      %v593 = vpop.f32.mrb[0].mxu0
      %594 = vmatprep.mubr.f32.mxu0 %v419
      %595 = vmatmul.mubr.f32.gmra.mrb[0].mxu0 %v387
      %v596 = vpop.f32.mrb[0].mxu0
      %v597 = vadd.f32 %v458, %v596
      %v598 = vpop.f32.mrb[0].mxu0
      %599 = vmatprep.mubr.f32.mxu0 %v420
      %600 = vmatmul.mubr.f32.gmra.mrb[0].mxu0 %v388
      %v601 = vpop.f32.mrb[0].mxu0
      %v602 = vadd.f32 %v458, %v601
      %v603 = vpop.f32.mrb[0].mxu0
      %604 = vdwg.mxu0
      %v605 = vmax.f32 %v527, 0.0
      %v606 = vmax.f32 %v532, 0.0
      %v607 = vmax.f32 %v537, 0.0
      %v608 = vmax.f32 %v542, 0.0
      %v609 = vmax.f32 %v547, 0.0
      %v610 = vmax.f32 %v552, 0.0
      %v611 = vmax.f32 %v557, 0.0
      %v612 = vmax.f32 %v562, 0.0
      %v613 = vmax.f32 %v567, 0.0
      %v614 = vmax.f32 %v572, 0.0
      %v615 = vmax.f32 %v577, 0.0
      %v616 = vmax.f32 %v582, 0.0
      %v617 = vmax.f32 %v587, 0.0
      %v618 = vmax.f32 %v592, 0.0
      %v619 = vmax.f32 %v597, 0.0
      %v620 = vmax.f32 %v602, 0.0
      %621 = vst [vmem:[#allocation11] sm:$0xff] %v605
      %622 = vst [vmem:[#allocation11 + $0x8] sm:$0xff] %v606
      %623 = vst [vmem:[#allocation11 + $0x10] sm:$0xff] %v607
      %624 = vst [vmem:[#allocation11 + $0x18] sm:$0xff] %v608
      %625 = vst [vmem:[#allocation11 + $0x20] sm:$0xff] %v609
      %626 = vst [vmem:[#allocation11 + $0x28] sm:$0xff] %v610
      %627 = vst [vmem:[#allocation11 + $0x30] sm:$0xff] %v611
      %628 = vst [vmem:[#allocation11 + $0x38] sm:$0xff] %v612
      %629 = vst [vmem:[#allocation11 + $0x40] sm:$0xff] %v613
      %630 = vst [vmem:[#allocation11 + $0x48] sm:$0xff] %v614
      %631 = vst [vmem:[#allocation11 + $0x50] sm:$0xff] %v615
      %632 = vst [vmem:[#allocation11 + $0x58] sm:$0xff] %v616
      %633 = vst [vmem:[#allocation11 + $0x60] sm:$0xff] %v617
      %634 = vst [vmem:[#allocation11 + $0x68] sm:$0xff] %v618
      %635 = vst [vmem:[#allocation11 + $0x70] sm:$0xff] %v619
      %636 = vst [vmem:[#allocation11 + $0x78] sm:$0xff] %v620
    $region45: #{tpu_custom_call.1} parent=1 // pred_fallthru
      _
    // Predicated region
    $region46: #{tpu_custom_call.1} parent=1 // pred_check
      _
    $region47: #{tpu_custom_call.1} parent=1 // pred_check_branch
      %638 = sbr.rel (0) target = $region49
    $region48: #{tpu_custom_call.1} parent=1 // pred_region
      %s640 = ssub.s32 2048, 2048
      %641 = vsyncadd [#allocation5], %s640
      %s642 = sshll.u32 [#allocation11], 4
      %s643 = int_to_ptr.vmem [resolvable:$true] %s642
      %648 = dma.vmem_to_hbm [thread:$0]  %s643, 2048, %s5, [#allocation5], 128, 128, 8
    $region49: #{tpu_custom_call.1} parent=1 // pred_fallthru
      _
    // Predicated region
    $region50: #{tpu_custom_call.1} parent=1 // pred_check
      _
    $region51: #{tpu_custom_call.1} parent=1 // pred_check_branch
      %650 = sbr.rel (0) target = $region53
    $region52: #{tpu_custom_call.1} parent=1 // pred_region
      %651 = dma.done [#allocation5], 2048
    $region53: #{tpu_custom_call.1} parent=1 // pred_fallthru
      _
    %652 = vsyncpa [#allocation4], 1
    %653 = vsyncpa [#allocation7], 1
    %654 = vsyncpa [#allocation10], 1
    %655 = vsyncpa [#allocation5], 1

</llo_original>
